<compile_context>
chip_gen: v5e
topology: v5e:2x2
jax: 0.10.0
libtpu: 0.0.40
codegen_flags: <defaults>
</compile_context>

<pallas_src>
import jax
import jax.numpy as jnp
from jax.experimental import pallas as pl
from jax.experimental.pallas import tpu as pltpu


def _backproj_matmul_kernel(w_ref, y_ref, o_ref):
    # w_ref: (M, K)      transposed coding matrix, resident across the grid
    # y_ref: (1, K, TN)  tile of the coded signal (native layout, K in sublanes)
    # o_ref: (1, M, TN)  lane-dense output tile
    o_ref[0] = jnp.dot(
        w_ref[...], y_ref[0], preferred_element_type=jnp.float32
    ).astype(o_ref.dtype)


def _choose_tn(N, K, M, vmem_budget_bytes=8 * 1024 * 1024):
    """Pick an N-tile: multiple of 128 (or full N), sized to ~vmem_budget."""
    kp = -(-K // 8) * 8   # sublane-padded K
    mp = -(-M // 8) * 8   # sublane-padded M
    bytes_per_lane = 2 * (kp + mp) * 4   # double-buffered f32 y-tile + out-tile
    max_tn = max(128, (vmem_budget_bytes // bytes_per_lane) // 128 * 128)
    if N <= max_tn:
        return N            # full dim is always a legal block extent
    if N % 128 == 0:
        tn = max_tn
        while tn >= 128:
            if N % tn == 0:
                return tn
            tn -= 128
    # TODO(synk): ragged N (not a multiple of 128) is not tiled; fall back to
    # one full-N block per batch.
    return N


def unfilt_backproj_3d_batch(y, W, *, tn=None):
    """y: (B, K, n1, n2, n3), W: (K, 1, b1, b2, b3) -> (B, 1, n1*b1, n2*b2, n3*b3)."""
    B, K, n1, n2, n3 = y.shape
    Kw, _, b1, b2, b3 = W.shape
    assert K == Kw, "channel mismatch between y and W"
    N = n1 * n2 * n3
    M = b1 * b2 * b3

    # Glue (free / tiny): flatten spatial dims in native order, transpose the
    # tiny coding matrix so the kernel computes (M,K)@(K,N).
    y_flat = y.reshape(B, K, N)        # (B, K, N) -- no data movement
    w_t = W.reshape(K, M).T            # (M, K)    -- tiny

    if tn is None:
        tn = _choose_tn(N, K, M)
    assert N % tn == 0 and (tn == N or tn % 128 == 0), (N, tn)

    out_flat = pl.pallas_call(
        _backproj_matmul_kernel,
        out_shape=jax.ShapeDtypeStruct((B, M, N), y.dtype),
        grid_spec=pltpu.PrefetchScalarGridSpec(
            num_scalar_prefetch=0,
            grid=(B, N // tn),
            in_specs=[
                pl.BlockSpec((M, K), lambda b, n: (0, 0)),        # resident W^T
                pl.BlockSpec((1, K, tn), lambda b, n: (b, 0, n)),  # y tile
            ],
            out_specs=pl.BlockSpec((1, M, tn), lambda b, n: (b, 0, n)),
        ),
        compiler_params=pltpu.CompilerParams(
            dimension_semantics=("parallel", "parallel"),
            vmem_limit_bytes=32 * 1024 * 1024,
        ),
    )(w_t, y_flat)

    # Glue: interleave block dims back into the upsampled spatial layout.
    # out_flat[b, (p,q,r), (i,j,l)] -> out[b, 0, i*b1+p, j*b2+q, l*b3+r]
    out = out_flat.reshape(B, b1, b2, b3, n1, n2, n3)
    out = jnp.transpose(out, (0, 4, 1, 5, 2, 6, 3))
    out = out.reshape(B, 1, n1 * b1, n2 * b2, n3 * b3)
    return out


def _reference(y, W):
    """Direct JAX port of the PyTorch forward (for verification only)."""
    B, K, n1, n2, n3 = y.shape
    _, _, b1, b2, b3 = W.shape
    y_up = jnp.repeat(jnp.repeat(jnp.repeat(y, b1, axis=2), b2, axis=3), b3, axis=4)
    W_up = jnp.tile(W, (1, 1, n1, n2, n3))  # (K, 1, n1*b1, n2*b2, n3*b3)
    return jnp.sum(y_up * W_up[:, 0][None], axis=1, keepdims=True)


if __name__ == "__main__":
    key = jax.random.PRNGKey(0)
    ky, kw, ky2 = jax.random.split(key, 3)

    # Case 1: small shapes, single full-N tile per batch.
    B, K = 2, 4
    n1, n2, n3 = 4, 4, 4
    b1, b2, b3 = 2, 2, 2
    y = jax.random.normal(ky, (B, K, n1, n2, n3), dtype=jnp.float32)
    W = jax.random.normal(kw, (K, 1, b1, b2, b3), dtype=jnp.float32)

    out = jax.block_until_ready(unfilt_backproj_3d_batch(y, W))
    ref = jax.block_until_ready(_reference(y, W))
    assert out.shape == (B, 1, n1 * b1, n2 * b2, n3 * b3), out.shape
    assert jnp.allclose(out, ref, atol=1e-5, rtol=1e-5), "mismatch vs reference (case 1)"

    # Case 2: exercise the tiled-N / pipelined path (N = 256, TN = 128 -> grid (B, 2)).
    m1, m2, m3 = 8, 8, 4
    y2 = jax.random.normal(ky2, (B, K, m1, m2, m3), dtype=jnp.float32)
    out2 = jax.block_until_ready(unfilt_backproj_3d_batch(y2, W, tn=128))
    ref2 = jax.block_until_ready(_reference(y2, W))
    assert out2.shape == (B, 1, m1 * b1, m2 * b2, m3 * b3), out2.shape
    assert jnp.allclose(out2, ref2, atol=1e-5, rtol=1e-5), "mismatch vs reference (case 2)"

    print("KERNEL_OK")
</pallas_src>

<mosaic_0001>
module attributes {stable_mosaic.version = 11 : i64} {
  func.func @_backproj_matmul_kernel(%arg0: i32, %arg1: i32, %arg2: memref<8x4xf32, #tpu.memory_space<vmem>>, %arg3: memref<1x4x64xf32, #tpu.memory_space<vmem>>, %arg4: memref<1x8x64xf32, #tpu.memory_space<vmem>>) attributes {dimension_semantics = [#tpu.dimension_semantics<parallel>, #tpu.dimension_semantics<parallel>], iteration_bounds = array<i64: 2, 1>, scalar_prefetch = 0 : i64, scratch_operands = 0 : i64, tpu.core_type = #tpu.core_type<tc>, window_params = [{pipeline_mode = #tpu.pipeline_mode<synchronous>, transform_indices = @transform_0, window_bounds = array<i64: 8, 4>}, {transform_indices = @transform_1, window_bounds = array<i64: 1, 4, 64>}, {transform_indices = @transform_2, window_bounds = array<i64: 1, 8, 64>}]} {
    %c0 = arith.constant 0 : index
    %c0_0 = arith.constant 0 : index
    %0 = vector.load %arg2[%c0, %c0_0] : memref<8x4xf32, #tpu.memory_space<vmem>>, vector<8x4xf32>
    %c0_1 = arith.constant 0 : index
    %c0_2 = arith.constant 0 : index
    %c0_3 = arith.constant 0 : index
    %1 = vector.load %arg3[%c0_1, %c0_2, %c0_3] : memref<1x4x64xf32, #tpu.memory_space<vmem>>, vector<1x4x64xf32>
    %2 = vector.shape_cast %1 : vector<1x4x64xf32> to vector<4x64xf32>
    %cst = arith.constant dense<0.000000e+00> : vector<8x64xf32>
    %3 = tpu.matmul %0, %2, %cst {dimension_numbers = #tpu.dot_dimension_numbers<[1], [0], [0], [1], [0, 0, 1, 1], [], []>} : vector<8x4xf32>, vector<4x64xf32>, vector<8x64xf32> -> vector<8x64xf32>
    %c0_4 = arith.constant 0 : index
    %c0_5 = arith.constant 0 : index
    %c0_6 = arith.constant 0 : index
    %4 = vector.load %arg4[%c0_4, %c0_5, %c0_6] : memref<1x8x64xf32, #tpu.memory_space<vmem>>, vector<1x8x64xf32>
    %5 = vector.shape_cast %4 : vector<1x8x64xf32> to vector<8x64xf32>
    %6 = vector.shape_cast %3 : vector<8x64xf32> to vector<1x8x64xf32>
    tpu.vector_store %arg4[%c0_4, %c0_5, %c0_6], %6 {strides = array<i32>} : memref<1x8x64xf32, #tpu.memory_space<vmem>>, vector<1x8x64xf32>,
    return
  }
  func.func @transform_0(%arg0: i32, %arg1: i32) -> (i32, i32) {
    %c0_i32 = arith.constant 0 : i32
    %c0_i32_0 = arith.constant 0 : i32
    %c0_i32_1 = arith.constant 0 : i32
    return %c0_i32, %c0_i32_0 : i32, i32
  }
  func.func @transform_1(%arg0: i32, %arg1: i32) -> (i32, i32, i32) {
    %c0_i32 = arith.constant 0 : i32
    %c0_i32_0 = arith.constant 0 : i32
    return %arg0, %c0_i32, %arg1 : i32, i32, i32
  }
  func.func @transform_2(%arg0: i32, %arg1: i32) -> (i32, i32, i32) {
    %c0_i32 = arith.constant 0 : i32
    %c0_i32_0 = arith.constant 0 : i32
    return %arg0, %c0_i32, %arg1 : i32, i32, i32
  }
}

</mosaic_0001>

<llo_original>
// kernel: tpu_custom_call.1
$region0: #{tpu_custom_call.1}
  #allocation0 [shape = 'u32[]', space=smem, size = 0x4, offset = 0x4, fixed_abs, tag = 'smem constant byte address 0x4 - core index']
  #allocation1 [shape = 'u32[72,128]{1,0:T(1,128)}', space=vmem, size = 0x9000, scoped, tag = 'internal scratch']
  %s0 = inlined_call_operand.vmem [shape: f32[8,4], index: 0, kind: input, shape index: {}]
  %s1 = inlined_call_operand.vmem [shape: f32[2,4,64], index: 1, kind: input, shape index: {}]
  %s2 = inlined_call_operand.hbm [shape: f32[2,8,64], index: 2, kind: output, shape index: {}]
  %s3 = sld [smem:[#allocation0]]
  $region41: #{tpu_custom_call.1} parent=0
    _
  %s5 = ssub.s32 1, %s3
  %s6 = scalar_select 0, %s5, %s3
  $region1: #{tpu_custom_call.1} parent=0
    #allocation2 [shape = 'u8[8192]{0}', space=vmem, size = 0x2000, scoped, tag = 'output window, operand 0']
    #allocation3 [shape = 's32[2]{0}', space=sflag, size = 0x8, scoped, tag = 'scoped memory for tpu_custom_call.1']
    %7 = vsyncpa [#allocation3], 0
    %s8 = scalar_lea.sflag [#allocation3], 1
    %9 = vsyncpa %s8, 0
    loop: start=0, step=1, limit=4
    $region2: #{tpu_custom_call.1} parent=1 // loop_pre_header
      _
    $region3: #{tpu_custom_call.1} parent=1 // loop_header
      %s11 = sphi 0, %s15
      %p12 = scmp.ge.s32.totalorder %s11, 4
      %s18 = sphi 0, %s30
      %s19 = sphi 0, %s26
      %s20 = sphi 0, %s18
      %s21 = sphi 0, %s19
      %s22 = sphi 0, %s20
      %s23 = sphi 0, %s21
      %s31 = sphi 0, %s31
      %s33 = sphi 0, %s31
      %s34 = sphi 0, %s33
      %s48 = sphi 0, %s34
      %s56 = sphi 0, %s58
      %s59 = sphi 0, %s56
      %s60 = sphi 0, %s59
      %s76 = sphi 0, %s60
      %s84 = sphi 0, %s86
      %s87 = sphi 0, %s84
      %s88 = sphi 0, %s87
      %s104 = sphi 0, %s88
    $region4: #{tpu_custom_call.1} parent=1 // loop_header_branch
      %14 = sbr.rel (%p12) target = $region8
    $region5: #{tpu_custom_call.1} parent=1 // loop_body
      %s16 = ssub.s32 %s11, 1
      %s17 = ssub.s32 %s11, 2
      %s24 = sadd.s32 1, %s19
      %p25 = scmp.ge.s32.totalorder %s24, 1
      %s26 = scalar_select %p25, 0, %s24
      %s27 = sadd.s32 1, %s18
      %s28 = scalar_select %p25, %s27, %s18
      %p29 = scmp.ge.s32.totalorder %s28, 2
      %s30 = scalar_select %p29, 0, %s28
      %s32 = sadd.s32 %s31, 1
      %p35 = scmp.eq.s32.totalorder %s11, 1
      %p36 = scmp.ne.s32.totalorder %s31, %s33
      %p37 = scmp.eq.s32.totalorder %s11, 0
      %p38 = por %p36, %p37
      %p39 = scmp.ne.s32.totalorder %s31, %s33
      %p40 = scmp.eq.s32.totalorder %s16, 1
      %p41 = por %p39, %p40
      %p42 = scmp.ne.s32.totalorder %s33, %s34
      %p43 = scmp.eq.s32.totalorder %s16, 0
      %p44 = por %p42, %p43
      %p45 = scmp.ne.s32.totalorder %s33, %s34
      %p46 = scmp.eq.s32.totalorder %s17, 1
      %p47 = por %p45, %p46
      %p49 = scmp.ne.s32.totalorder %s34, %s48
      %p50 = scmp.eq.s32.totalorder %s17, 0
      %p51 = por %p49, %p50
      %s52 = ssub.s32 %s18, %s30
      %s53 = ssub.s32 %s19, %s26
      %s54 = sor.u32 %s52, %s53
      %p55 = scmp.eq.s32.totalorder %s54, 0
      %s57 = sadd.s32 %s56, 1
      %s58 = scalar_select %p55, %s56, %s57
      %p61 = pneg %p55
      %p62 = scmp.eq.s32.totalorder %s11, 1
      %p63 = por %p61, %p62
      %p64 = scmp.ne.s32.totalorder %s56, %s59
      %p65 = scmp.eq.s32.totalorder %s11, 0
      %p66 = por %p64, %p65
      %p67 = scmp.ne.s32.totalorder %s56, %s59
      %p68 = scmp.eq.s32.totalorder %s16, 1
      %p69 = por %p67, %p68
      %p70 = scmp.ne.s32.totalorder %s59, %s60
      %p71 = scmp.eq.s32.totalorder %s16, 0
      %p72 = por %p70, %p71
      %p73 = scmp.ne.s32.totalorder %s59, %s60
      %p74 = scmp.eq.s32.totalorder %s17, 1
      %p75 = por %p73, %p74
      %p77 = scmp.ne.s32.totalorder %s60, %s76
      %p78 = scmp.eq.s32.totalorder %s17, 0
      %p79 = por %p77, %p78
      %s80 = ssub.s32 %s18, %s30
      %s81 = ssub.s32 %s19, %s26
      %s82 = sor.u32 %s80, %s81
      %p83 = scmp.eq.s32.totalorder %s82, 0
      %s85 = sadd.s32 %s84, 1
      %s86 = scalar_select %p83, %s84, %s85
      %p89 = pneg %p83
      %p90 = scmp.eq.s32.totalorder %s11, 1
      %p91 = por %p89, %p90
      %p92 = scmp.ne.s32.totalorder %s84, %s87
      %p93 = scmp.eq.s32.totalorder %s11, 0
      %p94 = por %p92, %p93
      %p95 = scmp.ne.s32.totalorder %s84, %s87
      %p96 = scmp.eq.s32.totalorder %s16, 1
      %p97 = por %p95, %p96
      %p98 = scmp.ne.s32.totalorder %s87, %s88
      %p99 = scmp.eq.s32.totalorder %s16, 0
      %p100 = por %p98, %p99
      %p101 = scmp.ne.s32.totalorder %s87, %s88
      %p102 = scmp.eq.s32.totalorder %s17, 1
      %p103 = por %p101, %p102
      %p105 = scmp.ne.s32.totalorder %s88, %s104
      %p106 = scmp.eq.s32.totalorder %s17, 0
      %p107 = por %p105, %p106
      %p108 = scmp.le.s32.totalorder 1, %s11
      %p109 = scmp.lt.s32.totalorder %s11, 3
      %p110 = pnand %p108, %p109
      %p111 = pneg %p110
      // Predicated region
      $region9: #{tpu_custom_call.1} parent=5 // pred_check
        _
      $region10: #{tpu_custom_call.1} parent=5 // pred_check_branch
        %113 = sbr.rel (%p110) target = $region12
      $region11: #{tpu_custom_call.1} parent=5 // pred_region
        %s114 = ssub.s32 %s11, 1
        // Predicated region
        $region13: #{tpu_custom_call.1} parent=11 // pred_check
          %p115 = pneg %p44
        $region14: #{tpu_custom_call.1} parent=11 // pred_check_branch
          %117 = sbr.rel (%p115) target = $region16
        $region15: #{tpu_custom_call.1} parent=11 // pred_region
          _
        $region16: #{tpu_custom_call.1} parent=11 // pred_fallthru
          _
      $region12: #{tpu_custom_call.1} parent=5 // pred_fallthru
        _
      %p118 = scmp.lt.s32.totalorder %s11, 2
      // Predicated region
      $region17: #{tpu_custom_call.1} parent=5 // pred_check
        %p119 = pneg %p118
      $region18: #{tpu_custom_call.1} parent=5 // pred_check_branch
        %121 = sbr.rel (%p119) target = $region20
      $region19: #{tpu_custom_call.1} parent=5 // pred_region
        // Predicated region
        $region21: #{tpu_custom_call.1} parent=19 // pred_check
          %p122 = pneg %p66
        $region22: #{tpu_custom_call.1} parent=19 // pred_check_branch
          %124 = sbr.rel (%p122) target = $region24
        $region23: #{tpu_custom_call.1} parent=19 // pred_region
          %p125 = scmp.lt.s32.totalorder %s18, 1
          %s126 = scalar_select %p125, %s18, 1
          %p127 = scmp.lt.s32.totalorder %s19, 0
          %s128 = scalar_select %p127, %s19, 0
          %s129 = sadd.s32 %s128, %s126
          %s130 = smul.addr %s129, 4
          %s131 = scalar_lea.vmem %s1, %s130
        $region24: #{tpu_custom_call.1} parent=19 // pred_fallthru
          _
      $region20: #{tpu_custom_call.1} parent=5 // pred_fallthru
        _
      %p132 = scmp.le.s32.totalorder 1, %s11
      %p133 = scmp.lt.s32.totalorder %s11, 3
      %p134 = pnand %p132, %p133
      %p135 = pneg %p134
      // Predicated region
      $region25: #{tpu_custom_call.1} parent=5 // pred_check
        _
      $region26: #{tpu_custom_call.1} parent=5 // pred_check_branch
        %137 = sbr.rel (%p134) target = $region28
      $region27: #{tpu_custom_call.1} parent=5 // pred_region
        %s138 = ssub.s32 %s11, 1
        %p139 = pneg %p44
        %p140 = pneg %p41
        %p141 = scmp.lt.s32.totalorder %s20, 1
        %s142 = scalar_select %p141, %s20, 1
        %p143 = scmp.lt.s32.totalorder %s21, 0
        %s144 = scalar_select %p143, %s21, 0
        %s145 = sadd.s32 %s144, %s142
        %s146 = smul.addr %s145, 4
        %s147 = scalar_lea.vmem %s1, %s146
        %p148 = pneg %p72
        %p149 = pneg %p69
        %p150 = pneg %p100
        %p151 = pneg %p97
        %s152 = sand.u32 %s87, 1
        %s153 = scalar_lea.sflag [#allocation3], %s152
        %s154 = sand.u32 %s87, 1
        %s155 = smul.addr %s154, 8
        %s156 = scalar_lea.vmem [#allocation2], %s155
        %p157 = scmp.lt.s32.totalorder %s20, 1
        %s158 = scalar_select %p157, %s20, 1
        %p159 = scmp.lt.s32.totalorder %s21, 0
        %s160 = scalar_select %p159, %s21, 0
        %s161 = sadd.s32 %s160, %s158
        %s162 = smul.addr %s161, 4
        %s163 = scalar_lea.vmem %s1, %s162
        %v164 = vld [vmem:[%s0] sm:$0xff]
        %v165 = vld [vmem:[%s163] sm:$0xf]
        %vm166 = vcmask 31744
        %v168 = vsel %vm166, %v164, 0
        %vm170 = vcmask 1043456
        %v172 = vsel %vm170, %v165, 0
        %174 = vmatpush.msra.mxu0 0.0
        %175 = vmatpush.msra.mxu0 0.0
        %176 = vmatpush.msra.mxu0 0.0
        %177 = vmatpush.msra.mxu0 0.0
        %178 = vmatpush.msra.mxu0 0.0
        %179 = vmatpush.msra.mxu0 0.0
        %180 = vmatpush.msra.mxu0 0.0
        %181 = vmatpush.msra.mxu0 0.0
        %182 = vmatpush.msra.mxu0 0.0
        %183 = vmatpush.msra.mxu0 0.0
        %184 = vmatpush.msra.mxu0 0.0
        %185 = vmatpush.msra.mxu0 0.0
        %186 = vmatpush.msra.mxu0 0.0
        %187 = vmatpush.msra.mxu0 0.0
        %188 = vmatpush.msra.mxu0 0.0
        %189 = vmatpush.msra.mxu0 %v172
        %190 = vmatmul.f32.gmra.mxu0 %v168
        %v191 = vpop.f32.mrf.mxu0
        %v192 = vadd.f32 0.0, %v191
        %193 = vdwg.mxu0
        %vm194 = vcmask 523264
        %195 = vst.msk [vmem:[%s156] sm:$0xff] %vm194, %v192
        %s196 = sand.u32 %s87, 1
        %s197 = scalar_lea.sflag [#allocation3], %s196
        %s198 = sand.u32 %s87, 1
        %s199 = smul.addr %s198, 8
        %s200 = scalar_lea.vmem [#allocation2], %s199
        // Predicated region
        $region29: #{tpu_custom_call.1} parent=27 // pred_check
          %p201 = pneg %p97
        $region30: #{tpu_custom_call.1} parent=27 // pred_check_branch
          %203 = sbr.rel (%p201) target = $region32
        $region31: #{tpu_custom_call.1} parent=27 // pred_region
          %205 = vsyncadd %s197, 0
          %s206 = sadd.s32 %s21, %s20
          %s207 = smul.addr %s206, 8
          %s208 = scalar_lea.hbm %s2, %s207
          %s210 = sshll.u32 %s200, 4
          %s211 = int_to_ptr.vmem [resolvable:$true] %s210
          %s212 = sshll.u32 %s208, 4
          %s213 = int_to_ptr.hbm [resolvable:$true] %s212
          %215 = dma.vmem_to_hbm [thread:$0]  %s211, 128, %s213, %s197
        $region32: #{tpu_custom_call.1} parent=27 // pred_fallthru
          _
      $region28: #{tpu_custom_call.1} parent=5 // pred_fallthru
        _
      %p216 = scmp.le.s32.totalorder 2, %s11
      // Predicated region
      $region33: #{tpu_custom_call.1} parent=5 // pred_check
        %p217 = pneg %p216
      $region34: #{tpu_custom_call.1} parent=5 // pred_check_branch
        %219 = sbr.rel (%p217) target = $region36
      $region35: #{tpu_custom_call.1} parent=5 // pred_region
        %s220 = ssub.s32 %s11, 2
        // Predicated region
        $region37: #{tpu_custom_call.1} parent=35 // pred_check
          %p221 = pneg %p103
        $region38: #{tpu_custom_call.1} parent=35 // pred_check_branch
          %223 = sbr.rel (%p221) target = $region40
        $region39: #{tpu_custom_call.1} parent=35 // pred_region
          %s224 = sand.u32 %s88, 1
          %s225 = scalar_lea.sflag [#allocation3], %s224
          %s226 = sand.u32 %s88, 1
          %s227 = smul.addr %s226, 8
          %s228 = scalar_lea.vmem [#allocation2], %s227
          %230 = dma.done %s225, 128
        $region40: #{tpu_custom_call.1} parent=35 // pred_fallthru
          _
      $region36: #{tpu_custom_call.1} parent=5 // pred_fallthru
        _
    $region6: #{tpu_custom_call.1} parent=1 // loop_footer
      %s15 = sadd.s32 1, %s11
    $region7: #{tpu_custom_call.1} parent=1 // loop_footer_branch
      %10 = sbr.rel target = $region3
    $region8: #{tpu_custom_call.1} parent=1 // loop_exit
      _
    %231 = vsyncpa [#allocation3], 1
    %s232 = scalar_lea.sflag [#allocation3], 1
    %233 = vsyncpa %s232, 1

</llo_original>
